<compile_context>
chip_gen: v6e
topology: v6e:2x2x1
jax: 0.10.0
libtpu: 0.0.40
codegen_flags: <defaults>
</compile_context>

<pallas_src>
import jax
import jax.numpy as jnp
from jax.experimental import pallas as pl
from jax.experimental.pallas import tpu as pltpu


_TILE_BYTE_BUDGET = 16 * 1024 * 1024   # double-buffered input+output row tiles
_VMEM_LIMIT_BYTES = 40 * 1024 * 1024   # > 16/32 MiB scoped defaults, < 64 MiB v7x physical


def _matmul_bias_kernel(x_ref, w_ref, b_ref, o_ref):
    # x_ref: (TM, Win)  w_ref: (Win, Wout)  b_ref: (1, Wout)  o_ref: (TM, Wout)
    acc = jnp.dot(x_ref[...], w_ref[...], preferred_element_type=jnp.float32)
    o_ref[...] = (acc + b_ref[...]).astype(o_ref.dtype)


def _choose_row_tile(n_rows, w_in, w_out, in_bytes, out_bytes):
    """Largest row tile whose double-buffered in+out tiles fit the byte budget."""
    per_row = 2 * (w_in * in_bytes + w_out * out_bytes)   # x2 for double buffering
    tm = _TILE_BYTE_BUDGET // max(per_row, 1)
    tm = int(max(8, min(tm, 2048)))
    tm -= tm % 8
    if tm >= n_rows:
        return n_rows            # single full block (full-dim blocks need no alignment)
    return tm


def _rows_matmul_bias(x_rows, w_mat, bias_row, out_dtype):
    """y = x_rows @ w_mat + bias_row, tiled over rows.

    x_rows: (R, Win), w_mat: (Win, Wout), bias_row: (1, Wout) -> (R, Wout)."""
    R, w_in = x_rows.shape
    w_out = w_mat.shape[1]
    tm = _choose_row_tile(R, w_in, w_out,
                          x_rows.dtype.itemsize, jnp.dtype(out_dtype).itemsize)
    grid = (pl.cdiv(R, tm),)
    return pl.pallas_call(
        _matmul_bias_kernel,
        out_shape=jax.ShapeDtypeStruct((R, w_out), out_dtype),
        grid_spec=pltpu.PrefetchScalarGridSpec(
            num_scalar_prefetch=0,
            grid=grid,
            in_specs=[
                pl.BlockSpec((tm, w_in), lambda t: (t, 0)),
                pl.BlockSpec((w_in, w_out), lambda t: (0, 0)),   # resident weight
                pl.BlockSpec((1, w_out), lambda t: (0, 0)),      # resident bias
            ],
            out_specs=pl.BlockSpec((tm, w_out), lambda t: (t, 0)),
        ),
        compiler_params=pltpu.CompilerParams(
            dimension_semantics=("parallel",),
            vmem_limit_bytes=_VMEM_LIMIT_BYTES,
        ),
    )(x_rows, w_mat, bias_row)


class MultiScaleSamplingLayerPallas:
    """JAX/Pallas port of MultiScaleSamplingLayer (channels-last interface (B, L, C))."""

    def __init__(self, scales, embedding_dim, key, compute_dtype=jnp.float32):
        self.scales = scales
        self.embedding_dim = embedding_dim
        self.compute_dtype = compute_dtype

        C = embedding_dim
        # Lane-packing group: fold G rows into one 128-wide super-row when C < 128.
        self.group = (128 // C) if (C < 128 and 128 % C == 0) else 1
        G = self.group

        self.weights = []    # raw conv weights (C_out, C_in, 2), kept for the reference
        self.biases = []     # raw biases (C_out,)
        self.w_mats = []     # (2C, C) matmul weights (compute dtype), precomputed once
        self.b_rows = []     # (1, C) f32 bias rows
        self.w_grps = []     # (G*2C, G*C) block-diagonal weights (lane-dense path)
        self.b_grps = []     # (1, G*C) tiled bias rows

        fan_in = C * 2
        bound = 1.0 / (fan_in ** 0.5)
        for _ in range(scales):
            key, kw, kb = jax.random.split(key, 3)
            w = jax.random.uniform(kw, (C, C, 2), minval=-bound, maxval=bound,
                                   dtype=jnp.float32)
            b = jax.random.uniform(kb, (C,), minval=-bound, maxval=bound,
                                   dtype=jnp.float32)
            self.weights.append(w)
            self.biases.append(b)

            w_mat = jnp.transpose(w, (2, 1, 0)).reshape(2 * C, C)
            self.w_mats.append(w_mat.astype(compute_dtype))
            self.b_rows.append(b.reshape(1, C))
            if G > 1:
                w_grp = jnp.kron(jnp.eye(G, dtype=jnp.float32), w_mat)
                self.w_grps.append(w_grp.astype(compute_dtype))
                self.b_grps.append(jnp.tile(b, G).reshape(1, G * C))
            else:
                self.w_grps.append(None)
                self.b_grps.append(None)

    def __call__(self, x):
        # x: (B, L, C) channels-last
        C = self.embedding_dim
        G = self.group
        outs = [x]
        cur = x
        for i in range(self.scales):
            B, L, _ = cur.shape
            Lh = L // 2
            # Match PyTorch Conv1d(k=2, s=2): drop a trailing odd element.
            xr = cur[:, : 2 * Lh, :].reshape(B * Lh, 2 * C)
            R = B * Lh
            out_dtype = cur.dtype
            if G > 1 and R % G == 0:
                x_in = xr.reshape(R // G, G * 2 * C).astype(self.compute_dtype)
                y = _rows_matmul_bias(x_in, self.w_grps[i], self.b_grps[i], out_dtype)
            else:
                x_in = xr.astype(self.compute_dtype)
                y = _rows_matmul_bias(x_in, self.w_mats[i], self.b_rows[i], out_dtype)
            y = y.reshape(B, Lh, C)
            outs.append(y)
            cur = y
        return outs


def _reference_forward(module, x):
    """Pure-JAX f32 reference (same math, no Pallas)."""
    C = module.embedding_dim
    outs = [x]
    cur = x
    for w, b in zip(module.weights, module.biases):
        B, L, _ = cur.shape
        Lh = L // 2
        xr = cur[:, : 2 * Lh, :].reshape(B, Lh, 2 * C)
        w_mat = jnp.transpose(w, (2, 1, 0)).reshape(2 * C, C)
        cur = jnp.einsum("blk,kc->blc", xr, w_mat) + b[None, None, :]
        outs.append(cur)
    return outs


if __name__ == "__main__":
    root = jax.random.PRNGKey(0)
    k_param, k_x, k_param2, k_x2, k_param3, k_x3 = jax.random.split(root, 6)

    # 1) Main check: embedding_dim=32 -> grouped lane-dense path, f32 compute.
    batch, seq_len, embedding_dim, scales = 2, 16, 32, 2
    module = MultiScaleSamplingLayerPallas(scales, embedding_dim, k_param)
    x = jax.random.normal(k_x, (batch, seq_len, embedding_dim), dtype=jnp.float32)
    outs = [jax.block_until_ready(o) for o in module(x)]
    refs = _reference_forward(module, x)
    assert len(outs) == scales + 1
    for s, (o, r) in enumerate(zip(outs, refs)):
        assert o.shape == (batch, seq_len // (2 ** s), embedding_dim), o.shape
        assert jnp.allclose(o, r, atol=1e-4, rtol=1e-4), (s, float(jnp.max(jnp.abs(o - r))))

    # 2) bfloat16 operands + f32 accumulation (loose tolerance vs f32 reference).
    module_bf16 = MultiScaleSamplingLayerPallas(scales, embedding_dim, k_param,
                                                compute_dtype=jnp.bfloat16)
    outs_bf16 = [jax.block_until_ready(o) for o in module_bf16(x)]
    refs_bf16 = _reference_forward(module_bf16, x)
    for o, r in zip(outs_bf16, refs_bf16):
        assert jnp.allclose(o, r, atol=5e-2, rtol=5e-2), float(jnp.max(jnp.abs(o - r)))

    # 3) embedding_dim=128 -> plain (already lane-aligned) path.
    module128 = MultiScaleSamplingLayerPallas(1, 128, k_param2)
    x128 = jax.random.normal(k_x2, (2, 8, 128), dtype=jnp.float32)
    outs128 = [jax.block_until_ready(o) for o in module128(x128)]
    refs128 = _reference_forward(module128, x128)
    for o, r in zip(outs128, refs128):
        assert jnp.allclose(o, r, atol=1e-4, rtol=1e-4), float(jnp.max(jnp.abs(o - r)))

    # 4) Odd sequence length + row count not divisible by the lane group (fallback path).
    module_odd = MultiScaleSamplingLayerPallas(2, 32, k_param3)
    x_odd = jax.random.normal(k_x3, (1, 5, 32), dtype=jnp.float32)
    outs_odd = [jax.block_until_ready(o) for o in module_odd(x_odd)]
    refs_odd = _reference_forward(module_odd, x_odd)
    expected_L = [5, 2, 1]
    for o, r, L_i in zip(outs_odd, refs_odd, expected_L):
        assert o.shape == (1, L_i, 32), o.shape
        assert jnp.allclose(o, r, atol=1e-4, rtol=1e-4), float(jnp.max(jnp.abs(o - r)))

    print("KERNEL_OK")
</pallas_src>

<mosaic_0001>
module attributes {stable_mosaic.version = 11 : i64} {
  func.func @_matmul_bias_kernel(%arg0: i32, %arg1: memref<4x256xf32, #tpu.memory_space<vmem>>, %arg2: memref<256x128xf32, #tpu.memory_space<vmem>>, %arg3: memref<1x128xf32, #tpu.memory_space<vmem>>, %arg4: memref<4x128xf32, #tpu.memory_space<vmem>>) attributes {dimension_semantics = [#tpu.dimension_semantics<parallel>], iteration_bounds = array<i64: 1>, scalar_prefetch = 0 : i64, scratch_operands = 0 : i64, tpu.core_type = #tpu.core_type<tc>, window_params = [{transform_indices = @transform_0, window_bounds = array<i64: 4, 256>}, {pipeline_mode = #tpu.pipeline_mode<synchronous>, transform_indices = @transform_1, window_bounds = array<i64: 256, 128>}, {pipeline_mode = #tpu.pipeline_mode<synchronous>, transform_indices = @transform_2, window_bounds = array<i64: 1, 128>}, {transform_indices = @transform_3, window_bounds = array<i64: 4, 128>}]} {
    %c0 = arith.constant 0 : index
    %c0_0 = arith.constant 0 : index
    %0 = vector.load %arg1[%c0, %c0_0] : memref<4x256xf32, #tpu.memory_space<vmem>>, vector<4x256xf32>
    %c0_1 = arith.constant 0 : index
    %c0_2 = arith.constant 0 : index
    %1 = vector.load %arg2[%c0_1, %c0_2] : memref<256x128xf32, #tpu.memory_space<vmem>>, vector<256x128xf32>
    %cst = arith.constant dense<0.000000e+00> : vector<4x128xf32>
    %2 = tpu.matmul %0, %1, %cst {dimension_numbers = #tpu.dot_dimension_numbers<[1], [0], [0], [1], [0, 0, 1, 1], [], []>} : vector<4x256xf32>, vector<256x128xf32>, vector<4x128xf32> -> vector<4x128xf32>
    %c0_3 = arith.constant 0 : index
    %c0_4 = arith.constant 0 : index
    %3 = vector.load %arg3[%c0_3, %c0_4] : memref<1x128xf32, #tpu.memory_space<vmem>>, vector<1x128xf32>
    %4 = vector.broadcast %3 : vector<1x128xf32> to vector<4x128xf32>
    %5 = arith.addf %2, %4 : vector<4x128xf32>
    %c0_5 = arith.constant 0 : index
    %c0_6 = arith.constant 0 : index
    %6 = vector.load %arg4[%c0_5, %c0_6] : memref<4x128xf32, #tpu.memory_space<vmem>>, vector<4x128xf32>
    tpu.vector_store %arg4[%c0_5, %c0_6], %5 {strides = array<i32>} : memref<4x128xf32, #tpu.memory_space<vmem>>, vector<4x128xf32>,
    return
  }
  func.func @transform_0(%arg0: i32) -> (i32, i32) {
    %c0_i32 = arith.constant 0 : i32
    %c0_i32_0 = arith.constant 0 : i32
    return %arg0, %c0_i32 : i32, i32
  }
  func.func @transform_1(%arg0: i32) -> (i32, i32) {
    %c0_i32 = arith.constant 0 : i32
    %c0_i32_0 = arith.constant 0 : i32
    %c0_i32_1 = arith.constant 0 : i32
    return %c0_i32, %c0_i32_0 : i32, i32
  }
  func.func @transform_2(%arg0: i32) -> (i32, i32) {
    %c0_i32 = arith.constant 0 : i32
    %c0_i32_0 = arith.constant 0 : i32
    %c0_i32_1 = arith.constant 0 : i32
    return %c0_i32, %c0_i32_0 : i32, i32
  }
  func.func @transform_3(%arg0: i32) -> (i32, i32) {
    %c0_i32 = arith.constant 0 : i32
    %c0_i32_0 = arith.constant 0 : i32
    return %arg0, %c0_i32 : i32, i32
  }
}

</mosaic_0001>

<llo_original>
// kernel: tpu_custom_call.1
$region0: #{tpu_custom_call.1}
  #allocation0 [shape = 'u32[]', space=smem, size = 0x4, offset = 0x4, fixed_abs, tag = 'smem constant byte address 0x4 - core index']
  #allocation1 [shape = 'u32[144,128]{1,0:T(1,128)}', space=vmem, size = 0x12000, scoped, tag = 'internal scratch']
  %s0 = inlined_call_operand.hbm [shape: f32[4,256], index: 0, kind: input, shape index: {}]
  %s1 = inlined_call_operand.hbm [shape: f32[256,128], index: 1, kind: input, shape index: {}]
  %s2 = inlined_call_operand.vmem [shape: f32[1,128], index: 2, kind: input, shape index: {}]
  %s3 = inlined_call_operand.hbm [shape: f32[4,128], index: 3, kind: output, shape index: {}]
  %s4 = sld [smem:[#allocation0]]
  $region30: #{tpu_custom_call.1} parent=0
    _
  %s6 = ssub.s32 1, %s4
  %s7 = scalar_select 0, %s6, %s4
  $region1: #{tpu_custom_call.1} parent=0
    #allocation2 [shape = 'u8[4096]{0}', space=vmem, size = 0x1000, scoped, tag = 'input window, operand 0, single buffered']
    #allocation3 [shape = 's32[1]{0}', space=sflag, size = 0x4, scoped, tag = 'scoped memory for tpu_custom_call.1']
    #allocation4 [shape = 's32[1]{0}', space=sflag, size = 0x4, scoped, tag = 'scoped memory for tpu_custom_call.1']
    #allocation5 [shape = 'u8[131072]{0}', space=vmem, size = 0x20000, scoped, tag = 'input window, operand 1, single buffered']
    #allocation6 [shape = 's32[1]{0}', space=sflag, size = 0x4, scoped, tag = 'scoped memory for tpu_custom_call.1']
    #allocation7 [shape = 'u8[2048]{0}', space=vmem, size = 0x800, scoped, tag = 'output window, operand 0, single buffered']
    %8 = vsyncpa [#allocation3], 0
    %9 = vsyncpa [#allocation6], 0
    %10 = vsyncpa [#allocation4], 0
    // Predicated region
    $region2: #{tpu_custom_call.1} parent=1 // pred_check
      _
    $region3: #{tpu_custom_call.1} parent=1 // pred_check_branch
      %12 = sbr.rel (0) target = $region5
    $region4: #{tpu_custom_call.1} parent=1 // pred_region
      %s14 = ssub.s32 128, 128
      %15 = vsyncadd [#allocation3], %s14
      %s17 = sshll.u32 [#allocation2], 4
      %s18 = int_to_ptr.vmem [resolvable:$true] %s17
      %20 = dma.hbm_to_vmem [thread:$0]  %s0, 128, %s18, [#allocation3]
    $region5: #{tpu_custom_call.1} parent=1 // pred_fallthru
      _
    // Predicated region
    $region6: #{tpu_custom_call.1} parent=1 // pred_check
      _
    $region7: #{tpu_custom_call.1} parent=1 // pred_check_branch
      %22 = sbr.rel (0) target = $region9
    $region8: #{tpu_custom_call.1} parent=1 // pred_region
      %s24 = ssub.s32 4096, 4096
      %25 = vsyncadd [#allocation6], %s24
      %s26 = sshll.u32 [#allocation5], 4
      %s27 = int_to_ptr.vmem [resolvable:$true] %s26
      %32 = dma.hbm_to_vmem [thread:$0]  %s1, 4096, %s27, [#allocation6], 128, 128, 8
    $region9: #{tpu_custom_call.1} parent=1 // pred_fallthru
      _
    // Predicated region
    $region10: #{tpu_custom_call.1} parent=1 // pred_check
      _
    $region11: #{tpu_custom_call.1} parent=1 // pred_check_branch
      %34 = sbr.rel (0) target = $region13
    $region12: #{tpu_custom_call.1} parent=1 // pred_region
      _
    $region13: #{tpu_custom_call.1} parent=1 // pred_fallthru
      _
    // Predicated region
    $region14: #{tpu_custom_call.1} parent=1 // pred_check
      _
    $region15: #{tpu_custom_call.1} parent=1 // pred_check_branch
      %36 = sbr.rel (0) target = $region17
    $region16: #{tpu_custom_call.1} parent=1 // pred_region
      %37 = dma.done [#allocation3], 128
    $region17: #{tpu_custom_call.1} parent=1 // pred_fallthru
      _
    // Predicated region
    $region18: #{tpu_custom_call.1} parent=1 // pred_check
      _
    $region19: #{tpu_custom_call.1} parent=1 // pred_check_branch
      %39 = sbr.rel (0) target = $region21
    $region20: #{tpu_custom_call.1} parent=1 // pred_region
      %40 = dma.done [#allocation6], 4096
    $region21: #{tpu_custom_call.1} parent=1 // pred_fallthru
      _
    %v41 = vld [vmem:[#allocation2] sm:$0xff]
    %v42 = vld [vmem:[#allocation5] sm:$0xff]
    %v43 = vld [vmem:[#allocation5 + $0x8] sm:$0xff]
    %v44 = vld [vmem:[#allocation5 + $0x10] sm:$0xff]
    %v45 = vld [vmem:[#allocation5 + $0x18] sm:$0xff]
    %v46 = vld [vmem:[#allocation5 + $0x20] sm:$0xff]
    %v47 = vld [vmem:[#allocation5 + $0x28] sm:$0xff]
    %v48 = vld [vmem:[#allocation5 + $0x30] sm:$0xff]
    %v49 = vld [vmem:[#allocation5 + $0x38] sm:$0xff]
    %v50 = vld [vmem:[#allocation5 + $0x40] sm:$0xff]
    %v51 = vld [vmem:[#allocation5 + $0x48] sm:$0xff]
    %v52 = vld [vmem:[#allocation5 + $0x50] sm:$0xff]
    %v53 = vld [vmem:[#allocation5 + $0x58] sm:$0xff]
    %v54 = vld [vmem:[#allocation5 + $0x60] sm:$0xff]
    %v55 = vld [vmem:[#allocation5 + $0x68] sm:$0xff]
    %v56 = vld [vmem:[#allocation5 + $0x70] sm:$0xff]
    %v57 = vld [vmem:[#allocation5 + $0x78] sm:$0xff]
    %v58 = vld [vmem:[#allocation5 + $0x80] sm:$0xff]
    %v59 = vld [vmem:[#allocation5 + $0x88] sm:$0xff]
    %v60 = vld [vmem:[#allocation5 + $0x90] sm:$0xff]
    %v61 = vld [vmem:[#allocation5 + $0x98] sm:$0xff]
    %v62 = vld [vmem:[#allocation5 + $0xa0] sm:$0xff]
    %v63 = vld [vmem:[#allocation5 + $0xa8] sm:$0xff]
    %v64 = vld [vmem:[#allocation5 + $0xb0] sm:$0xff]
    %v65 = vld [vmem:[#allocation5 + $0xb8] sm:$0xff]
    %v66 = vld [vmem:[#allocation5 + $0xc0] sm:$0xff]
    %v67 = vld [vmem:[#allocation5 + $0xc8] sm:$0xff]
    %v68 = vld [vmem:[#allocation5 + $0xd0] sm:$0xff]
    %v69 = vld [vmem:[#allocation5 + $0xd8] sm:$0xff]
    %v70 = vld [vmem:[#allocation5 + $0xe0] sm:$0xff]
    %v71 = vld [vmem:[#allocation5 + $0xe8] sm:$0xff]
    %v72 = vld [vmem:[#allocation5 + $0xf0] sm:$0xff]
    %v73 = vld [vmem:[#allocation5 + $0xf8] sm:$0xff]
    %v74 = vld [vmem:[%s2] sm:$0x1]
    %v76 = vlaneseq
    %v77 = vshrl.u32 %v76, 7
    %v78 = vsub.s32 0, %v77
    %v79 = vrot.slane %v74, %v78
    %v82 = vcombine.high %v41, %v41
    %84 = vmatprep.subr.mxu0 0.0
    %85 = vmatpush1.msra.mxu0 %v57
    %86 = vmatprep.subr.mxu0 0.0
    %87 = vmatpush1.msra.mxu0 %v56
    %88 = vmatprep.subr.mxu0 0.0
    %89 = vmatpush1.msra.mxu0 %v55
    %90 = vmatprep.subr.mxu0 0.0
    %91 = vmatpush1.msra.mxu0 %v54
    %92 = vmatprep.subr.mxu0 0.0
    %93 = vmatpush1.msra.mxu0 %v53
    %94 = vmatprep.subr.mxu0 0.0
    %95 = vmatpush1.msra.mxu0 %v52
    %96 = vmatprep.subr.mxu0 0.0
    %97 = vmatpush1.msra.mxu0 %v51
    %98 = vmatprep.subr.mxu0 0.0
    %99 = vmatpush1.msra.mxu0 %v50
    %100 = vmatprep.subr.mxu0 0.0
    %101 = vmatpush1.msra.mxu0 %v49
    %102 = vmatprep.subr.mxu0 0.0
    %103 = vmatpush1.msra.mxu0 %v48
    %104 = vmatprep.subr.mxu0 0.0
    %105 = vmatpush1.msra.mxu0 %v47
    %106 = vmatprep.subr.mxu0 0.0
    %107 = vmatpush1.msra.mxu0 %v46
    %108 = vmatprep.subr.mxu0 0.0
    %109 = vmatpush1.msra.mxu0 %v45
    %110 = vmatprep.subr.mxu0 0.0
    %111 = vmatpush1.msra.mxu0 %v44
    %112 = vmatprep.subr.mxu0 0.0
    %113 = vmatpush1.msra.mxu0 %v43
    %114 = vmatprep.subr.mxu0 0.0
    %115 = vmatpush1.msra.mxu0 %v42
    %116 = vmatprep.subr.mxu0 0.0
    %117 = vmatpush2.msra.mxu0 %v73
    %118 = vmatprep.subr.mxu0 0.0
    %119 = vmatpush2.msra.mxu0 %v72
    %120 = vmatprep.subr.mxu0 0.0
    %121 = vmatpush2.msra.mxu0 %v71
    %122 = vmatprep.subr.mxu0 0.0
    %123 = vmatpush2.msra.mxu0 %v70
    %124 = vmatprep.subr.mxu0 0.0
    %125 = vmatpush2.msra.mxu0 %v69
    %126 = vmatprep.subr.mxu0 0.0
    %127 = vmatpush2.msra.mxu0 %v68
    %128 = vmatprep.subr.mxu0 0.0
    %129 = vmatpush2.msra.mxu0 %v67
    %130 = vmatprep.subr.mxu0 0.0
    %131 = vmatpush2.msra.mxu0 %v66
    %132 = vmatprep.subr.mxu0 0.0
    %133 = vmatpush2.msra.mxu0 %v65
    %134 = vmatprep.subr.mxu0 0.0
    %135 = vmatpush2.msra.mxu0 %v64
    %136 = vmatprep.subr.mxu0 0.0
    %137 = vmatpush2.msra.mxu0 %v63
    %138 = vmatprep.subr.mxu0 0.0
    %139 = vmatpush2.msra.mxu0 %v62
    %140 = vmatprep.subr.mxu0 0.0
    %141 = vmatpush2.msra.mxu0 %v61
    %142 = vmatprep.subr.mxu0 0.0
    %143 = vmatpush2.msra.mxu0 %v60
    %144 = vmatprep.subr.mxu0 0.0
    %145 = vmatpush2.msra.mxu0 %v59
    %146 = vmatprep.subr.mxu0 0.0
    %147 = vmatpush2.msra.mxu0 %v58
    %148 = vmatprep.mubr.f32.mxu0 %v82
    %149 = vmatmul.mubr.f32.gmra.mxu0 %v41
    %v150 = vpop.f32.mrf.mxu0
    %v151 = vadd.f32 %v79, %v150
    %v152 = vpop.f32.mrf.mxu0
    %153 = vdwg.mxu0
    %154 = vst [vmem:[#allocation7] sm:$0xf] %v151
    // Predicated region
    $region22: #{tpu_custom_call.1} parent=1 // pred_check
      _
    $region23: #{tpu_custom_call.1} parent=1 // pred_check_branch
      %156 = sbr.rel (0) target = $region25
    $region24: #{tpu_custom_call.1} parent=1 // pred_region
      %s158 = ssub.s32 64, 64
      %159 = vsyncadd [#allocation4], %s158
      %s161 = sshll.u32 [#allocation7], 4
      %s162 = int_to_ptr.vmem [resolvable:$true] %s161
      %164 = dma.vmem_to_hbm [thread:$0]  %s162, 64, %s3, [#allocation4]
    $region25: #{tpu_custom_call.1} parent=1 // pred_fallthru
      _
    // Predicated region
    $region26: #{tpu_custom_call.1} parent=1 // pred_check
      _
    $region27: #{tpu_custom_call.1} parent=1 // pred_check_branch
      %166 = sbr.rel (0) target = $region29
    $region28: #{tpu_custom_call.1} parent=1 // pred_region
      %167 = dma.done [#allocation4], 64
    $region29: #{tpu_custom_call.1} parent=1 // pred_fallthru
      _
    %168 = vsyncpa [#allocation3], 1
    %169 = vsyncpa [#allocation6], 1
    %170 = vsyncpa [#allocation4], 1

</llo_original>
